<compile_context>
chip_gen: v6e
topology: v6e:2x2x1
jax: 0.10.0
libtpu: 0.0.40
codegen_flags: <defaults>
</compile_context>

<pallas_src>
import jax
import jax.numpy as jnp
from jax.experimental import pallas as pl
from jax.experimental.pallas import tpu as pltpu


def _lr_kernel(params_ref, xt_ref, ot_ref):
    # params_ref: SMEM (3,) f32  = [w00, w01, bias]
    # xt_ref:     VMEM (2, TB) f32  -- batch along the lane axis
    # ot_ref:     VMEM (1, TB) f32  -- lane-dense output
    w0 = params_ref[0]
    w1 = params_ref[1]
    b = params_ref[2]

    x0 = xt_ref[0:1, :]                      # (1, TB)
    x1 = xt_ref[1:2, :]                      # (1, TB)

    # Linear: x @ W^T + b  ==  x0*w00 + x1*w01 + b  (2 VPU FMAs, no MXU)
    z = x0 * w0 + x1 * w1 + b

    # Sigmoid: exp on EUP, approximate reciprocal also rides the EUP slot.
    e = jnp.exp(-z)
    ot_ref[...] = pl.reciprocal(1.0 + e, approx=True)


def lr_forward(x, weight, bias, *, block_b=8192):
    """Logistic regression forward: sigmoid(x @ W^T + b).

    x:      (B, 2) float32
    weight: (1, 2) float32
    bias:   (1,)   float32
    returns (B, 1) float32
    """
    B, IN = x.shape
    OUT = weight.shape[0]
    assert IN == 2 and OUT == 1, "LR module is Linear(2, 1)"

    # Three scalars in one flat SMEM array: [w00, w01, bias].
    params = jnp.concatenate(
        [weight.reshape(-1).astype(jnp.float32), bias.reshape(-1).astype(jnp.float32)]
    )

    # Layout plumbing in the wrapper: batch -> lane axis (lane-dense loads/stores).
    x_t = x.astype(jnp.float32).T            # (2, B)

    if B <= block_b:
        # Single block covering the whole array (legal: block == full dims).
        tb = B
        bp = B
    else:
        # Tile the batch; TB is a multiple of 128, pad batch up to a multiple of TB.
        tb = block_b
        bp = pl.cdiv(B, tb) * tb
        if bp != B:
            x_t = jnp.pad(x_t, ((0, 0), (0, bp - B)))

    grid = (bp // tb,)

    out_t = pl.pallas_call(
        _lr_kernel,
        out_shape=jax.ShapeDtypeStruct((1, bp), jnp.float32),
        grid_spec=pltpu.PrefetchScalarGridSpec(
            num_scalar_prefetch=0,
            grid=grid,
            in_specs=[
                # 3 scalars, whole array in SMEM (no VMEM tile, no extra DMA padding).
                pl.BlockSpec(memory_space=pltpu.MemorySpace.SMEM),
                # x^T tile: (2, TB), batch on lanes.
                pl.BlockSpec((IN, tb), lambda i: (0, i)),
            ],
            # Lane-dense output tile (1, TB).
            out_specs=pl.BlockSpec((1, tb), lambda i: (0, i)),
        ),
        compiler_params=pltpu.CompilerParams(
            # Batch axis is independent -> lets v7x shard it across its 2 TCs.
            dimension_semantics=("parallel",),
        ),
    )(params, x_t)

    # Back to the PyTorch layout (B, 1); drop any batch padding.
    return out_t[:, :B].T.astype(x.dtype)


def init_params(key, in_features=2, out_features=1):
    # Mimic torch.nn.Linear default init: U(-1/sqrt(fan_in), 1/sqrt(fan_in))
    kw, kb = jax.random.split(key)
    bound = 1.0 / jnp.sqrt(jnp.float32(in_features))
    weight = jax.random.uniform(
        kw, (out_features, in_features), jnp.float32, minval=-bound, maxval=bound
    )
    bias = jax.random.uniform(
        kb, (out_features,), jnp.float32, minval=-bound, maxval=bound
    )
    return weight, bias


if __name__ == "__main__":
    key = jax.random.PRNGKey(0)
    k_x, k_p, k_x2 = jax.random.split(key, 3)

    weight, bias = init_params(k_p, in_features=2, out_features=1)

    # Small shape consistent with the module: batch=8, in_features=2, out_features=1.
    x = jax.random.normal(k_x, (8, 2), dtype=jnp.float32)
    out = jax.block_until_ready(lr_forward(x, weight, bias))
    ref = jax.nn.sigmoid(x @ weight.T + bias)
    assert out.shape == (8, 1)
    assert jnp.allclose(out, ref, atol=2e-3, rtol=2e-3), (out, ref)

    # Exercise the tiled / padded batch path (grid > 1) with a non-multiple batch.
    x2 = jax.random.normal(k_x2, (300, 2), dtype=jnp.float32)
    out2 = jax.block_until_ready(lr_forward(x2, weight, bias, block_b=128))
    ref2 = jax.nn.sigmoid(x2 @ weight.T + bias)
    assert out2.shape == (300, 1)
    assert jnp.allclose(out2, ref2, atol=2e-3, rtol=2e-3)

    print("KERNEL_OK")
</pallas_src>

<mosaic_0001>
module attributes {stable_mosaic.version = 11 : i64} {
  func.func @_lr_kernel(%arg0: i32, %arg1: memref<3xf32, #tpu.memory_space<smem>>, %arg2: memref<2x8xf32, #tpu.memory_space<vmem>>, %arg3: memref<1x8xf32, #tpu.memory_space<vmem>>) attributes {dimension_semantics = [#tpu.dimension_semantics<parallel>], iteration_bounds = array<i64: 1>, scalar_prefetch = 0 : i64, scratch_operands = 0 : i64, tpu.core_type = #tpu.core_type<tc>, window_params = [{transform_indices = @transform_0, window_bounds = array<i64: 3>}, {transform_indices = @transform_1, window_bounds = array<i64: 2, 8>}, {transform_indices = @transform_2, window_bounds = array<i64: 1, 8>}]} {
    %c0 = arith.constant 0 : index
    %0 = memref.load %arg1[%c0] : memref<3xf32, #tpu.memory_space<smem>>
    %c1 = arith.constant 1 : index
    %1 = memref.load %arg1[%c1] : memref<3xf32, #tpu.memory_space<smem>>
    %c2 = arith.constant 2 : index
    %2 = memref.load %arg1[%c2] : memref<3xf32, #tpu.memory_space<smem>>
    %c0_0 = arith.constant 0 : index
    %c0_1 = arith.constant 0 : index
    %3 = vector.load %arg2[%c0_0, %c0_1] : memref<2x8xf32, #tpu.memory_space<vmem>>, vector<1x8xf32>
    %c1_2 = arith.constant 1 : index
    %c0_3 = arith.constant 0 : index
    %4 = vector.load %arg2[%c1_2, %c0_3] : memref<2x8xf32, #tpu.memory_space<vmem>>, vector<1x8xf32>
    %5 = vector.broadcast %0 : f32 to vector<1x8xf32>
    %6 = arith.mulf %3, %5 : vector<1x8xf32>
    %7 = vector.broadcast %1 : f32 to vector<1x8xf32>
    %8 = arith.mulf %4, %7 : vector<1x8xf32>
    %9 = arith.addf %6, %8 : vector<1x8xf32>
    %10 = vector.broadcast %2 : f32 to vector<1x8xf32>
    %11 = arith.addf %9, %10 : vector<1x8xf32>
    %cst = arith.constant 0.000000e+00 : f32
    %12 = vector.broadcast %cst : f32 to vector<1x8xf32>
    %13 = arith.subf %12, %11 : vector<1x8xf32>
    %14 = math.exp %13 : vector<1x8xf32>
    %cst_4 = arith.constant 1.000000e+00 : f32
    %15 = vector.broadcast %cst_4 : f32 to vector<1x8xf32>
    %16 = arith.addf %15, %14 : vector<1x8xf32>
    %17 = tpu.reciprocal %16 {approx = true} : vector<1x8xf32> -> vector<1x8xf32>
    %c0_5 = arith.constant 0 : index
    %c0_6 = arith.constant 0 : index
    %18 = vector.load %arg3[%c0_5, %c0_6] : memref<1x8xf32, #tpu.memory_space<vmem>>, vector<1x8xf32>
    tpu.vector_store %arg3[%c0_5, %c0_6], %17 {strides = array<i32>} : memref<1x8xf32, #tpu.memory_space<vmem>>, vector<1x8xf32>,
    return
  }
  func.func @transform_0(%arg0: i32) -> i32 {
    %c0_i32 = arith.constant 0 : i32
    %c0_i32_0 = arith.constant 0 : i32
    return %c0_i32 : i32
  }
  func.func @transform_1(%arg0: i32) -> (i32, i32) {
    %c0_i32 = arith.constant 0 : i32
    %c0_i32_0 = arith.constant 0 : i32
    return %c0_i32, %arg0 : i32, i32
  }
  func.func @transform_2(%arg0: i32) -> (i32, i32) {
    %c0_i32 = arith.constant 0 : i32
    %c0_i32_0 = arith.constant 0 : i32
    return %c0_i32, %arg0 : i32, i32
  }
}

</mosaic_0001>

<llo_original>
// kernel: tpu_custom_call.1
$region0: #{tpu_custom_call.1}
  #allocation0 [shape = 'u32[]', space=smem, size = 0x4, offset = 0x4, fixed_abs, tag = 'smem constant byte address 0x4 - core index']
  #allocation1 [shape = 'u32[144,128]{1,0:T(1,128)}', space=vmem, size = 0x12000, scoped, tag = 'internal scratch']
  %s0 = inlined_call_operand.hbm [shape: f32[3], index: 0, kind: input, shape index: {}]
  %s1 = inlined_call_operand.hbm [shape: f32[2,8], index: 1, kind: input, shape index: {}]
  %s2 = inlined_call_operand.hbm [shape: f32[1,8], index: 2, kind: output, shape index: {}]
  %s3 = sld [smem:[#allocation0]]
  $region26: #{tpu_custom_call.1} parent=0
    _
  %s5 = ssub.s32 1, %s3
  %s6 = scalar_select 0, %s5, %s3
  $region1: #{tpu_custom_call.1} parent=0
    #allocation2 [shape = 'u8[512]{0}', space=smem, size = 0x200, scoped, tag = 'input window, operand 0, single buffered']
    #allocation3 [shape = 's32[1]{0}', space=sflag, size = 0x4, scoped, tag = 'scoped memory for tpu_custom_call.1']
    #allocation4 [shape = 's32[1]{0}', space=sflag, size = 0x4, scoped, tag = 'scoped memory for tpu_custom_call.1']
    #allocation5 [shape = 's32[1]{0}', space=sflag, size = 0x4, scoped, tag = 'scoped memory for tpu_custom_call.1']
    #allocation6 [shape = 'u8[1024]{0}', space=vmem, size = 0x400, scoped, tag = 'input window, operand 1, single buffered']
    #allocation7 [shape = 'u8[512]{0}', space=vmem, size = 0x400, scoped, tag = 'output window, operand 0, single buffered']
    %7 = vsyncpa [#allocation5], 0
    %8 = vsyncpa [#allocation3], 0
    %9 = vsyncpa [#allocation4], 0
    // Predicated region
    $region2: #{tpu_custom_call.1} parent=1 // pred_check
      _
    $region3: #{tpu_custom_call.1} parent=1 // pred_check_branch
      %11 = sbr.rel (0) target = $region5
    $region4: #{tpu_custom_call.1} parent=1 // pred_region
      %s13 = ssub.s32 16, 16
      %14 = vsyncadd [#allocation5], %s13
      %17 = dma.hbm_to_smem %s0, 16, [#allocation2], [#allocation5]
    $region5: #{tpu_custom_call.1} parent=1 // pred_fallthru
      _
    // Predicated region
    $region6: #{tpu_custom_call.1} parent=1 // pred_check
      _
    $region7: #{tpu_custom_call.1} parent=1 // pred_check_branch
      %19 = sbr.rel (0) target = $region9
    $region8: #{tpu_custom_call.1} parent=1 // pred_region
      %s21 = ssub.s32 32, 32
      %22 = vsyncadd [#allocation3], %s21
      %s24 = sshll.u32 [#allocation6], 4
      %s25 = int_to_ptr.vmem [resolvable:$true] %s24
      %27 = dma.hbm_to_vmem [thread:$0]  %s1, 32, %s25, [#allocation3]
    $region9: #{tpu_custom_call.1} parent=1 // pred_fallthru
      _
    // Predicated region
    $region10: #{tpu_custom_call.1} parent=1 // pred_check
      _
    $region11: #{tpu_custom_call.1} parent=1 // pred_check_branch
      %29 = sbr.rel (0) target = $region13
    $region12: #{tpu_custom_call.1} parent=1 // pred_region
      %30 = dma.done [#allocation5], 16
    $region13: #{tpu_custom_call.1} parent=1 // pred_fallthru
      _
    // Predicated region
    $region14: #{tpu_custom_call.1} parent=1 // pred_check
      _
    $region15: #{tpu_custom_call.1} parent=1 // pred_check_branch
      %32 = sbr.rel (0) target = $region17
    $region16: #{tpu_custom_call.1} parent=1 // pred_region
      %33 = dma.done [#allocation3], 32
    $region17: #{tpu_custom_call.1} parent=1 // pred_fallthru
      _
    %34 = sfence
    %s35 = sld [smem:[#allocation2]]
    %s36 = sld [smem:[#allocation2 + $0x1]]
    %s37 = sld [smem:[#allocation2 + $0x2]]
    %v38 = vld [vmem:[#allocation6] sm:$0x1]
    %v39 = vld [vmem:[#allocation6 + $0x1] sm:$0x1]
    %v40 = vstv %s35
    %v41 = vmul.f32 %v38, %v40
    %v42 = vstv %s36
    %v43 = vmul.f32 %v39, %v42
    %v44 = vadd.f32 %v41, %v43
    %v45 = vstv %s37
    %v46 = vadd.f32 %v44, %v45
    %v47 = vsub.f32 0.0, %v46
    %v48 = vmul.f32 %v47, 1.442695
    %v49 = vpow.pop %v48
    %v50 = vadd.f32 %v49, 1.0
    %v51 = vrcp.pop %v50
    %vm52 = vcmask 57344
    %53 = vst.msk [vmem:[#allocation7] sm:$0x1] %vm52, %v51
    // Predicated region
    $region18: #{tpu_custom_call.1} parent=1 // pred_check
      _
    $region19: #{tpu_custom_call.1} parent=1 // pred_check_branch
      %55 = sbr.rel (0) target = $region21
    $region20: #{tpu_custom_call.1} parent=1 // pred_region
      %s57 = ssub.s32 16, 16
      %58 = vsyncadd [#allocation4], %s57
      %s60 = sshll.u32 [#allocation7], 4
      %s61 = int_to_ptr.vmem [resolvable:$true] %s60
      %63 = dma.vmem_to_hbm [thread:$0]  %s61, 16, %s2, [#allocation4]
    $region21: #{tpu_custom_call.1} parent=1 // pred_fallthru
      _
    // Predicated region
    $region22: #{tpu_custom_call.1} parent=1 // pred_check
      _
    $region23: #{tpu_custom_call.1} parent=1 // pred_check_branch
      %65 = sbr.rel (0) target = $region25
    $region24: #{tpu_custom_call.1} parent=1 // pred_region
      %66 = dma.done [#allocation4], 16
    $region25: #{tpu_custom_call.1} parent=1 // pred_fallthru
      _
    %67 = vsyncpa [#allocation3], 1
    %68 = vsyncpa [#allocation4], 1
    %69 = vsyncpa [#allocation5], 1

</llo_original>
